<compile_context>
chip_gen: v5e
topology: v5e:2x2
jax: 0.10.0
libtpu: 0.0.40
codegen_flags: <defaults>
</compile_context>

<pallas_src>
import math

import jax
import jax.numpy as jnp
from jax.experimental import pallas as pl
from jax.experimental.pallas import tpu as pltpu


_VMEM_LIMIT = 32 * 1024 * 1024  # safe on v5e/v6e/v7x; raises v5e's 16 MiB scoped default


def _pick_block(dim, target):
    """Largest block <= target that divides `dim` and is a multiple of 8 (or full dim)."""
    if dim <= target:
        return dim
    start = (target // 8) * 8
    for cand in range(start, 7, -8):
        if dim % cand == 0:
            return cand
    return dim  # fall back to a full-extent block


def _layernorm(x, g, b, eps):
    mu = jnp.mean(x, axis=-1, keepdims=True)
    var = jnp.mean(jnp.square(x - mu), axis=-1, keepdims=True)
    return (x - mu) * jax.lax.rsqrt(var + eps) * g + b


# --------------------------- kernel 1: LN1 + QKV projection ---------------------------
def make_ln_qkv_kernel(eps):
    def kernel(x_ref, g_ref, b_ref, w_ref, wb_ref, o_ref):
        x = x_ref[0].astype(jnp.float32)                               # (tt, C)
        h = _layernorm(x, g_ref[...], b_ref[...], eps)
        y = jnp.dot(h.astype(jnp.bfloat16), w_ref[...],
                    preferred_element_type=jnp.float32) + wb_ref[...]  # (tt, 3C)
        o_ref[0] = y.astype(o_ref.dtype)
    return kernel


# ---------------- kernel 2: flash attention + c_proj + residual ----------------
def make_flash_attn_kernel(n_head, head_dim, blk, scale):
    inv_sqrt_hd = 1.0 / math.sqrt(head_dim)

    def kernel(q_ref, k_ref, v_ref, x_ref, pw_ref, pb_ref, o_ref,
               m_sc, l_sc, acc_sc):
        qi = pl.program_id(1)
        ki = pl.program_id(2)

        @pl.when(ki == 0)
        def _init():
            m_sc[...] = jnp.full(m_sc.shape, -jnp.inf, jnp.float32)
            l_sc[...] = jnp.zeros(l_sc.shape, jnp.float32)
            acc_sc[...] = jnp.zeros(acc_sc.shape, jnp.float32)

        @pl.when(ki <= qi)  # causal block skipping (q-block size == kv-block size)
        def _compute():
            q = q_ref[0]    # (H, blk, hd) bf16
            k = k_ref[0]    # (H, blk, hd) bf16
            v = v_ref[0]    # (H, blk, hd) bf16
            if scale:       # fold 1/sqrt(hd) into q: O(T*hd) instead of O(T^2)
                q = (q.astype(jnp.float32) * inv_sqrt_hd).astype(q.dtype)
            # contraction on last dims of both operands (no k transpose)
            s = jnp.einsum('hqd,hkd->hqk', q, k,
                           preferred_element_type=jnp.float32)          # (H, blk, blk)
            row = qi * blk + jax.lax.broadcasted_iota(jnp.int32, (blk, blk), 0)
            col = ki * blk + jax.lax.broadcasted_iota(jnp.int32, (blk, blk), 1)
            s = jnp.where((col <= row)[None, :, :], s, -10000.0)        # GPT-2 masked_bias
            m_prev = m_sc[...]
            m_new = jnp.maximum(m_prev, jnp.max(s, axis=-1, keepdims=True))
            alpha = jnp.exp(m_prev - m_new)
            p = jnp.exp(s - m_new)
            l_sc[...] = alpha * l_sc[...] + jnp.sum(p, axis=-1, keepdims=True)
            acc_sc[...] = alpha * acc_sc[...] + jnp.einsum(
                'hqk,hkd->hqd', p.astype(v.dtype), v,
                preferred_element_type=jnp.float32)
            m_sc[...] = m_new

        @pl.when(ki == qi)  # last KV block this query block attends to
        def _finalize():
            inv_l = pl.reciprocal(l_sc[...], approx=True)               # EUP slot
            out = (acc_sc[...] * inv_l).astype(jnp.bfloat16)            # (H, blk, hd)
            # c_proj as a batched per-head matmul + head sum (no concat/relayout)
            partial = jnp.einsum('hqd,hdc->hqc', out, pw_ref[...],
                                 preferred_element_type=jnp.float32)    # (H, blk, C)
            a = jnp.sum(partial, axis=0) + pb_ref[...]                  # (blk, C)
            o_ref[0] = (x_ref[0].astype(jnp.float32) + a).astype(o_ref.dtype)

    return kernel


# --------------------- kernel 3: LN2 + MLP (gelu_new) + residual ---------------------
def make_mlp_kernel(eps):
    c0 = math.sqrt(2.0 / math.pi)

    def kernel(x_ref, g_ref, b_ref, fcw_ref, fcb_ref, pw_ref, pb_ref, o_ref):
        x = x_ref[0].astype(jnp.float32)                                 # (tt, C)
        h = _layernorm(x, g_ref[...], b_ref[...], eps)
        h = jnp.dot(h.astype(jnp.bfloat16), fcw_ref[...],
                    preferred_element_type=jnp.float32) + fcb_ref[...]   # (tt, 4C)
        h = 0.5 * h * (1.0 + jnp.tanh(c0 * (h + 0.044715 * (h * h * h))))  # gelu_new
        h2 = jnp.dot(h.astype(jnp.bfloat16), pw_ref[...],
                     preferred_element_type=jnp.float32) + pb_ref[...]   # (tt, C)
        o_ref[0] = (x + h2).astype(o_ref.dtype)
    return kernel


# ----------------------------------- wrapper -----------------------------------
def block_forward(x, params, *, n_head, eps=1e-5, scale=False):
    """x: (B, T, C) float32.  params: dict of weights (see init_params)."""
    B, T, C = x.shape
    assert C % n_head == 0
    hd = C // n_head
    bf16 = jnp.bfloat16

    # bf16 copies of the matmul weights (MXU operands); biases/LN params stay f32.
    attn_w = params["attn_w"].astype(bf16)                       # (C, 3C)
    proj_w = params["proj_w"].astype(bf16).reshape(n_head, hd, C)  # (H, hd, C)
    fc_w = params["fc_w"].astype(bf16)                           # (C, 4C)
    mproj_w = params["mproj_w"].astype(bf16)                     # (4C, C)

    tt = _pick_block(T, 256)    # row block for LN/matmul kernels
    blk = _pick_block(T, 128)   # q/kv block for flash attention
    nt = T // tt
    nq = T // blk

    # ---- 1. LayerNorm1 + fused QKV projection ----
    qkv = pl.pallas_call(
        make_ln_qkv_kernel(eps),
        out_shape=jax.ShapeDtypeStruct((B, T, 3 * C), bf16),
        grid=(B, nt),
        in_specs=[
            pl.BlockSpec((1, tt, C), lambda b, t: (b, t, 0)),
            pl.BlockSpec((1, C), lambda b, t: (0, 0)),
            pl.BlockSpec((1, C), lambda b, t: (0, 0)),
            pl.BlockSpec((C, 3 * C), lambda b, t: (0, 0)),
            pl.BlockSpec((1, 3 * C), lambda b, t: (0, 0)),
        ],
        out_specs=pl.BlockSpec((1, tt, 3 * C), lambda b, t: (b, t, 0)),
        compiler_params=pltpu.CompilerParams(
            dimension_semantics=("parallel", "parallel"),
            vmem_limit_bytes=_VMEM_LIMIT),
        cost_estimate=pl.CostEstimate(
            flops=2 * B * T * C * 3 * C,
            transcendentals=B * T,
            bytes_accessed=4 * B * T * C + 2 * C * 3 * C + 2 * B * T * 3 * C),
    )(x, params["ln1_w"], params["ln1_b"], attn_w, params["attn_b"])

    # Split heads outside the kernel (layout plumbing: 128-lane clean head layout,
    # keeps the kernels free of cross-lane relayouts).
    q, k, v = jnp.split(qkv, 3, axis=-1)

    def to_heads(t):
        return t.reshape(B, T, n_head, hd).transpose(0, 2, 1, 3)  # (B, H, T, hd)

    qh, kh, vh = to_heads(q), to_heads(k), to_heads(v)

    # ---- 2. Flash attention (online softmax, causal block skipping) + c_proj + residual ----
    x1 = pl.pallas_call(
        make_flash_attn_kernel(n_head, hd, blk, scale),
        out_shape=jax.ShapeDtypeStruct((B, T, C), x.dtype),
        grid=(B, nq, nq),
        in_specs=[
            pl.BlockSpec((1, n_head, blk, hd), lambda b, qi, ki: (b, 0, qi, 0)),
            pl.BlockSpec((1, n_head, blk, hd), lambda b, qi, ki: (b, 0, ki, 0)),
            pl.BlockSpec((1, n_head, blk, hd), lambda b, qi, ki: (b, 0, ki, 0)),
            pl.BlockSpec((1, blk, C), lambda b, qi, ki: (b, qi, 0)),
            pl.BlockSpec((n_head, hd, C), lambda b, qi, ki: (0, 0, 0)),
            pl.BlockSpec((1, C), lambda b, qi, ki: (0, 0)),
        ],
        out_specs=pl.BlockSpec((1, blk, C), lambda b, qi, ki: (b, qi, 0)),
        scratch_shapes=[
            pltpu.VMEM((n_head, blk, 1), jnp.float32),    # running max
            pltpu.VMEM((n_head, blk, 1), jnp.float32),    # running denominator
            pltpu.VMEM((n_head, blk, hd), jnp.float32),   # output accumulator
        ],
        compiler_params=pltpu.CompilerParams(
            dimension_semantics=("parallel", "parallel", "arbitrary"),
            vmem_limit_bytes=_VMEM_LIMIT),
        cost_estimate=pl.CostEstimate(
            flops=2 * B * n_head * T * T * hd + 2 * B * T * C * C,
            transcendentals=B * n_head * T * T,
            bytes_accessed=6 * B * T * C + 8 * B * T * C + 2 * C * C),
    )(qh, kh, vh, x, proj_w, params["proj_b"])

    # ---- 3. LayerNorm2 + MLP + residual ----
    # TODO(synk): for very large C, stream fc_w/mproj_w over a hidden-dim grid axis
    # (with an accumulator scratch) instead of keeping both resident, to fit v7x's
    # smaller VMEM; resident weights are fine at GPT-2-small scale.
    out = pl.pallas_call(
        make_mlp_kernel(eps),
        out_shape=jax.ShapeDtypeStruct((B, T, C), x.dtype),
        grid=(B, nt),
        in_specs=[
            pl.BlockSpec((1, tt, C), lambda b, t: (b, t, 0)),
            pl.BlockSpec((1, C), lambda b, t: (0, 0)),
            pl.BlockSpec((1, C), lambda b, t: (0, 0)),
            pl.BlockSpec((C, 4 * C), lambda b, t: (0, 0)),
            pl.BlockSpec((1, 4 * C), lambda b, t: (0, 0)),
            pl.BlockSpec((4 * C, C), lambda b, t: (0, 0)),
            pl.BlockSpec((1, C), lambda b, t: (0, 0)),
        ],
        out_specs=pl.BlockSpec((1, tt, C), lambda b, t: (b, t, 0)),
        compiler_params=pltpu.CompilerParams(
            dimension_semantics=("parallel", "parallel"),
            vmem_limit_bytes=_VMEM_LIMIT),
        cost_estimate=pl.CostEstimate(
            flops=16 * B * T * C * C,
            transcendentals=B * T * 4 * C,
            bytes_accessed=8 * B * T * C + 16 * C * C),
    )(x1, params["ln2_w"], params["ln2_b"], fc_w, params["fc_b"],
      mproj_w, params["mproj_b"])

    return out


# ----------------------------- params & pure-JAX reference -----------------------------
def init_params(key, C):
    """Deterministic parameter init mirroring the PyTorch module __init__."""
    ks = jax.random.split(key, 4)
    std = 0.02
    return {
        "ln1_w": jnp.ones((1, C), jnp.float32),
        "ln1_b": jnp.zeros((1, C), jnp.float32),
        "attn_w": std * jax.random.normal(ks[0], (C, 3 * C), jnp.float32),
        "attn_b": jnp.zeros((1, 3 * C), jnp.float32),
        "proj_w": std * jax.random.normal(ks[1], (C, C), jnp.float32),
        "proj_b": jnp.zeros((1, C), jnp.float32),
        "ln2_w": jnp.ones((1, C), jnp.float32),
        "ln2_b": jnp.zeros((1, C), jnp.float32),
        "fc_w": std * jax.random.normal(ks[2], (C, 4 * C), jnp.float32),
        "fc_b": jnp.zeros((1, 4 * C), jnp.float32),
        "mproj_w": std * jax.random.normal(ks[3], (4 * C, C), jnp.float32),
        "mproj_b": jnp.zeros((1, C), jnp.float32),
    }


def block_reference(x, params, *, n_head, eps=1e-5, scale=False):
    """Pure-JAX f32 reference matching the PyTorch Block forward (eval mode)."""
    B, T, C = x.shape
    hd = C // n_head

    def ln(v, w, b):
        mu = jnp.mean(v, axis=-1, keepdims=True)
        var = jnp.mean((v - mu) ** 2, axis=-1, keepdims=True)
        return (v - mu) / jnp.sqrt(var + eps) * w + b

    h = ln(x, params["ln1_w"][0], params["ln1_b"][0])
    qkv = h @ params["attn_w"] + params["attn_b"][0]
    q, k, v = jnp.split(qkv, 3, axis=-1)
    q = q.reshape(B, T, n_head, hd).transpose(0, 2, 1, 3)
    k = k.reshape(B, T, n_head, hd).transpose(0, 2, 1, 3)
    v = v.reshape(B, T, n_head, hd).transpose(0, 2, 1, 3)
    w = jnp.einsum("bhqd,bhkd->bhqk", q, k)
    if scale:
        w = w / math.sqrt(hd)
    mask = jnp.tril(jnp.ones((T, T), bool))
    w = jnp.where(mask, w, jnp.float32(-10000.0))
    p = jax.nn.softmax(w, axis=-1)
    a = jnp.einsum("bhqk,bhkd->bhqd", p, v).transpose(0, 2, 1, 3).reshape(B, T, C)
    a = a @ params["proj_w"] + params["proj_b"][0]
    x = x + a

    h2 = ln(x, params["ln2_w"][0], params["ln2_b"][0])
    h2 = h2 @ params["fc_w"] + params["fc_b"][0]
    h2 = 0.5 * h2 * (1.0 + jnp.tanh(math.sqrt(2.0 / math.pi)
                                    * (h2 + 0.044715 * h2 ** 3)))
    h2 = h2 @ params["mproj_w"] + params["mproj_b"][0]
    return x + h2


if __name__ == "__main__":
    # bf16 MXU operands -> compare against the f32 reference with a loosened tolerance.
    TOL = 2e-2

    # Test 1: tiny shapes (single block per axis).
    B, T, C, n_head = 2, 8, 32, 4
    key = jax.random.PRNGKey(0)
    kx, kp = jax.random.split(key)
    x = jax.random.normal(kx, (B, T, C), jnp.float32)
    params = init_params(kp, C)

    out = jax.block_until_ready(block_forward(x, params, n_head=n_head))
    ref = block_reference(x, params, n_head=n_head)
    assert out.shape == (B, T, C)
    assert jnp.allclose(out, ref, rtol=TOL, atol=TOL), "mismatch vs reference (small)"

    # Test 2: exercises sequence tiling, causal block skipping and the multi-block grid.
    B2, T2, C2, n_head2 = 1, 256, 128, 4
    kx2, kp2 = jax.random.split(jax.random.PRNGKey(0), 2)
    x2 = jax.random.normal(kx2, (B2, T2, C2), jnp.float32)
    params2 = init_params(kp2, C2)

    out2 = jax.block_until_ready(block_forward(x2, params2, n_head=n_head2))
    ref2 = block_reference(x2, params2, n_head=n_head2)
    assert out2.shape == (B2, T2, C2)
    assert jnp.allclose(out2, ref2, rtol=TOL, atol=TOL), "mismatch vs reference (tiled)"

    print("KERNEL_OK")
</pallas_src>

<mosaic_0001>
module attributes {stable_mosaic.version = 11 : i64} {
  func.func @kernel(%arg0: i32, %arg1: i32, %arg2: memref<1x8x32xf32, #tpu.memory_space<vmem>>, %arg3: memref<1x32xf32, #tpu.memory_space<vmem>>, %arg4: memref<1x32xf32, #tpu.memory_space<vmem>>, %arg5: memref<32x96xbf16, #tpu.memory_space<vmem>>, %arg6: memref<1x96xf32, #tpu.memory_space<vmem>>, %arg7: memref<1x8x96xbf16, #tpu.memory_space<vmem>>) attributes {dimension_semantics = [#tpu.dimension_semantics<parallel>, #tpu.dimension_semantics<parallel>], iteration_bounds = array<i64: 2, 1>, scalar_prefetch = 0 : i64, scratch_operands = 0 : i64, tpu.core_type = #tpu.core_type<tc>, window_params = [{transform_indices = @transform_0, window_bounds = array<i64: 1, 8, 32>}, {pipeline_mode = #tpu.pipeline_mode<synchronous>, transform_indices = @transform_1, window_bounds = array<i64: 1, 32>}, {pipeline_mode = #tpu.pipeline_mode<synchronous>, transform_indices = @transform_2, window_bounds = array<i64: 1, 32>}, {pipeline_mode = #tpu.pipeline_mode<synchronous>, transform_indices = @transform_3, window_bounds = array<i64: 32, 96>}, {pipeline_mode = #tpu.pipeline_mode<synchronous>, transform_indices = @transform_4, window_bounds = array<i64: 1, 96>}, {transform_indices = @transform_5, window_bounds = array<i64: 1, 8, 96>}]} {
    %c0 = arith.constant 0 : index
    %c0_0 = arith.constant 0 : index
    %c0_1 = arith.constant 0 : index
    %0 = vector.load %arg2[%c0, %c0_0, %c0_1] : memref<1x8x32xf32, #tpu.memory_space<vmem>>, vector<1x8x32xf32>
    %1 = vector.shape_cast %0 : vector<1x8x32xf32> to vector<8x32xf32>
    %c0_2 = arith.constant 0 : index
    %c0_3 = arith.constant 0 : index
    %2 = vector.load %arg3[%c0_2, %c0_3] : memref<1x32xf32, #tpu.memory_space<vmem>>, vector<1x32xf32>
    %c0_4 = arith.constant 0 : index
    %c0_5 = arith.constant 0 : index
    %3 = vector.load %arg4[%c0_4, %c0_5] : memref<1x32xf32, #tpu.memory_space<vmem>>, vector<1x32xf32>
    %cst = arith.constant dense<0.000000e+00> : vector<8xf32>
    %4 = vector.multi_reduction <add>, %1, %cst [1] : vector<8x32xf32> to vector<8xf32>
    %5 = vector.shape_cast %4 : vector<8xf32> to vector<8x1xf32>
    %cst_6 = arith.constant 3.200000e+01 : f32
    %6 = vector.broadcast %cst_6 : f32 to vector<8x1xf32>
    %7 = arith.divf %5, %6 : vector<8x1xf32>
    %8 = vector.broadcast %7 : vector<8x1xf32> to vector<8x32xf32>
    %9 = arith.subf %1, %8 : vector<8x32xf32>
    %10 = arith.mulf %9, %9 : vector<8x32xf32>
    %cst_7 = arith.constant dense<0.000000e+00> : vector<8xf32>
    %11 = vector.multi_reduction <add>, %10, %cst_7 [1] : vector<8x32xf32> to vector<8xf32>
    %12 = vector.shape_cast %11 : vector<8xf32> to vector<8x1xf32>
    %cst_8 = arith.constant 3.200000e+01 : f32
    %13 = vector.broadcast %cst_8 : f32 to vector<8x1xf32>
    %14 = arith.divf %12, %13 : vector<8x1xf32>
    %15 = vector.broadcast %7 : vector<8x1xf32> to vector<8x32xf32>
    %16 = arith.subf %1, %15 : vector<8x32xf32>
    %cst_9 = arith.constant 9.99999974E-6 : f32
    %17 = vector.broadcast %cst_9 : f32 to vector<8x1xf32>
    %18 = arith.addf %14, %17 : vector<8x1xf32>
    %19 = math.rsqrt %18 : vector<8x1xf32>
    %20 = vector.broadcast %19 : vector<8x1xf32> to vector<8x32xf32>
    %21 = arith.mulf %16, %20 : vector<8x32xf32>
    %22 = vector.broadcast %2 : vector<1x32xf32> to vector<8x32xf32>
    %23 = arith.mulf %21, %22 : vector<8x32xf32>
    %24 = vector.broadcast %3 : vector<1x32xf32> to vector<8x32xf32>
    %25 = arith.addf %23, %24 : vector<8x32xf32>
    %26 = arith.truncf %25 : vector<8x32xf32> to vector<8x32xbf16>
    %c0_10 = arith.constant 0 : index
    %c0_11 = arith.constant 0 : index
    %27 = vector.load %arg5[%c0_10, %c0_11] : memref<32x96xbf16, #tpu.memory_space<vmem>>, vector<32x96xbf16>
    %cst_12 = arith.constant dense<0.000000e+00> : vector<8x96xf32>
    %28 = tpu.matmul %26, %27, %cst_12 {dimension_numbers = #tpu.dot_dimension_numbers<[1], [0], [0], [1], [0, 0, 1, 1], [], []>} : vector<8x32xbf16>, vector<32x96xbf16>, vector<8x96xf32> -> vector<8x96xf32>
    %c0_13 = arith.constant 0 : index
    %c0_14 = arith.constant 0 : index
    %29 = vector.load %arg6[%c0_13, %c0_14] : memref<1x96xf32, #tpu.memory_space<vmem>>, vector<1x96xf32>
    %30 = vector.broadcast %29 : vector<1x96xf32> to vector<8x96xf32>
    %31 = arith.addf %28, %30 : vector<8x96xf32>
    %32 = arith.truncf %31 : vector<8x96xf32> to vector<8x96xbf16>
    %c0_15 = arith.constant 0 : index
    %c0_16 = arith.constant 0 : index
    %c0_17 = arith.constant 0 : index
    %33 = vector.load %arg7[%c0_15, %c0_16, %c0_17] : memref<1x8x96xbf16, #tpu.memory_space<vmem>>, vector<1x8x96xbf16>
    %34 = vector.shape_cast %33 : vector<1x8x96xbf16> to vector<8x96xbf16>
    %35 = vector.shape_cast %32 : vector<8x96xbf16> to vector<1x8x96xbf16>
    tpu.vector_store %arg7[%c0_15, %c0_16, %c0_17], %35 {strides = array<i32>} : memref<1x8x96xbf16, #tpu.memory_space<vmem>>, vector<1x8x96xbf16>,
    return
  }
  func.func @transform_0(%arg0: i32, %arg1: i32) -> (i32, i32, i32) {
    %c0_i32 = arith.constant 0 : i32
    %c0_i32_0 = arith.constant 0 : i32
    return %arg0, %arg1, %c0_i32 : i32, i32, i32
  }
  func.func @transform_1(%arg0: i32, %arg1: i32) -> (i32, i32) {
    %c0_i32 = arith.constant 0 : i32
    %c0_i32_0 = arith.constant 0 : i32
    %c0_i32_1 = arith.constant 0 : i32
    return %c0_i32, %c0_i32_0 : i32, i32
  }
  func.func @transform_2(%arg0: i32, %arg1: i32) -> (i32, i32) {
    %c0_i32 = arith.constant 0 : i32
    %c0_i32_0 = arith.constant 0 : i32
    %c0_i32_1 = arith.constant 0 : i32
    return %c0_i32, %c0_i32_0 : i32, i32
  }
  func.func @transform_3(%arg0: i32, %arg1: i32) -> (i32, i32) {
    %c0_i32 = arith.constant 0 : i32
    %c0_i32_0 = arith.constant 0 : i32
    %c0_i32_1 = arith.constant 0 : i32
    return %c0_i32, %c0_i32_0 : i32, i32
  }
  func.func @transform_4(%arg0: i32, %arg1: i32) -> (i32, i32) {
    %c0_i32 = arith.constant 0 : i32
    %c0_i32_0 = arith.constant 0 : i32
    %c0_i32_1 = arith.constant 0 : i32
    return %c0_i32, %c0_i32_0 : i32, i32
  }
  func.func @transform_5(%arg0: i32, %arg1: i32) -> (i32, i32, i32) {
    %c0_i32 = arith.constant 0 : i32
    %c0_i32_0 = arith.constant 0 : i32
    return %arg0, %arg1, %c0_i32 : i32, i32, i32
  }
}

</mosaic_0001>

<llo_original>
// kernel: tpu_custom_call.1
$region0: #{tpu_custom_call.1}
  #allocation0 [shape = 'u32[]', space=smem, size = 0x4, offset = 0x4, fixed_abs, tag = 'smem constant byte address 0x4 - core index']
  #allocation1 [shape = 'u32[72,128]{1,0:T(1,128)}', space=vmem, size = 0x9000, scoped, tag = 'internal scratch']
  %s0 = inlined_call_operand.hbm [shape: f32[2,8,32], index: 0, kind: input, shape index: {}]
  %s1 = inlined_call_operand.hbm [shape: f32[1,32], index: 1, kind: input, shape index: {}]
  %s2 = inlined_call_operand.vmem [shape: f32[1,32], index: 2, kind: input, shape index: {}]
  %s3 = inlined_call_operand.hbm [shape: bf16[32,96], index: 3, kind: input, shape index: {}]
  %s4 = inlined_call_operand.vmem [shape: f32[1,96], index: 4, kind: input, shape index: {}]
  %s5 = inlined_call_operand.hbm [shape: bf16[2,8,96], index: 5, kind: output, shape index: {}]
  %s6 = sld [smem:[#allocation0]]
  $region65: #{tpu_custom_call.1} parent=0
    _
  %s8 = ssub.s32 1, %s6
  %s9 = scalar_select 0, %s8, %s6
  $region1: #{tpu_custom_call.1} parent=0
    #allocation2 [shape = 'u8[8192]{0}', space=vmem, size = 0x2000, scoped, tag = 'input window, operand 0']
    #allocation3 [shape = 's32[2]{0}', space=sflag, size = 0x8, scoped, tag = 'scoped memory for tpu_custom_call.1']
    #allocation4 [shape = 's32[2]{0}', space=sflag, size = 0x8, scoped, tag = 'scoped memory for tpu_custom_call.1']
    #allocation5 [shape = 'u8[512]{0}', space=vmem, size = 0x400, scoped, tag = 'input window, operand 1, single buffered']
    #allocation6 [shape = 's32[1]{0}', space=sflag, size = 0x4, scoped, tag = 'scoped memory for tpu_custom_call.1']
    #allocation7 [shape = 'u8[8192]{0}', space=vmem, size = 0x2000, scoped, tag = 'input window, operand 3, single buffered']
    #allocation8 [shape = 'u8[4096]{0}', space=vmem, size = 0x1000, scoped, tag = 'output window, operand 0']
    %10 = vsyncpa [#allocation3], 0
    %s11 = scalar_lea.sflag [#allocation3], 1
    %12 = vsyncpa %s11, 0
    %13 = vsyncpa [#allocation6], 0
    %14 = vsyncpa [#allocation4], 0
    %s15 = scalar_lea.sflag [#allocation4], 1
    %16 = vsyncpa %s15, 0
    loop: start=0, step=1, limit=4
    $region2: #{tpu_custom_call.1} parent=1 // loop_pre_header
      _
    $region3: #{tpu_custom_call.1} parent=1 // loop_header
      %s18 = sphi 0, %s22
      %p19 = scmp.ge.s32.totalorder %s18, 4
      %s25 = sphi 0, %s37
      %s26 = sphi 0, %s33
      %s27 = sphi 0, %s25
      %s28 = sphi 0, %s26
      %s29 = sphi 0, %s27
      %s30 = sphi 0, %s28
      %s42 = sphi 0, %s44
      %s45 = sphi 0, %s42
      %s46 = sphi 0, %s45
      %s62 = sphi 0, %s46
      %s66 = sphi 0, %s66
      %s68 = sphi 0, %s66
      %s69 = sphi 0, %s68
      %s83 = sphi 0, %s69
      %s87 = sphi 0, %s87
      %s89 = sphi 0, %s87
      %s90 = sphi 0, %s89
      %s104 = sphi 0, %s90
      %s108 = sphi 0, %s108
      %s110 = sphi 0, %s108
      %s111 = sphi 0, %s110
      %s125 = sphi 0, %s111
      %s129 = sphi 0, %s129
      %s131 = sphi 0, %s129
      %s132 = sphi 0, %s131
      %s146 = sphi 0, %s132
      %s154 = sphi 0, %s156
      %s157 = sphi 0, %s154
      %s158 = sphi 0, %s157
      %s174 = sphi 0, %s158
    $region4: #{tpu_custom_call.1} parent=1 // loop_header_branch
      %21 = sbr.rel (%p19) target = $region8
    $region5: #{tpu_custom_call.1} parent=1 // loop_body
      %s23 = ssub.s32 %s18, 1
      %s24 = ssub.s32 %s18, 2
      %s31 = sadd.s32 1, %s26
      %p32 = scmp.ge.s32.totalorder %s31, 1
      %s33 = scalar_select %p32, 0, %s31
      %s34 = sadd.s32 1, %s25
      %s35 = scalar_select %p32, %s34, %s25
      %p36 = scmp.ge.s32.totalorder %s35, 2
      %s37 = scalar_select %p36, 0, %s35
      %s38 = ssub.s32 %s25, %s37
      %s39 = ssub.s32 %s26, %s33
      %s40 = sor.u32 %s38, %s39
      %p41 = scmp.eq.s32.totalorder %s40, 0
      %s43 = sadd.s32 %s42, 1
      %s44 = scalar_select %p41, %s42, %s43
      %p47 = pneg %p41
      %p48 = scmp.eq.s32.totalorder %s18, 1
      %p49 = por %p47, %p48
      %p50 = scmp.ne.s32.totalorder %s42, %s45
      %p51 = scmp.eq.s32.totalorder %s18, 0
      %p52 = por %p50, %p51
      %p53 = scmp.ne.s32.totalorder %s42, %s45
      %p54 = scmp.eq.s32.totalorder %s23, 1
      %p55 = por %p53, %p54
      %p56 = scmp.ne.s32.totalorder %s45, %s46
      %p57 = scmp.eq.s32.totalorder %s23, 0
      %p58 = por %p56, %p57
      %p59 = scmp.ne.s32.totalorder %s45, %s46
      %p60 = scmp.eq.s32.totalorder %s24, 1
      %p61 = por %p59, %p60
      %p63 = scmp.ne.s32.totalorder %s46, %s62
      %p64 = scmp.eq.s32.totalorder %s24, 0
      %p65 = por %p63, %p64
      %s67 = sadd.s32 %s66, 1
      %p70 = scmp.eq.s32.totalorder %s18, 1
      %p71 = scmp.ne.s32.totalorder %s66, %s68
      %p72 = scmp.eq.s32.totalorder %s18, 0
      %p73 = por %p71, %p72
      %p74 = scmp.ne.s32.totalorder %s66, %s68
      %p75 = scmp.eq.s32.totalorder %s23, 1
      %p76 = por %p74, %p75
      %p77 = scmp.ne.s32.totalorder %s68, %s69
      %p78 = scmp.eq.s32.totalorder %s23, 0
      %p79 = por %p77, %p78
      %p80 = scmp.ne.s32.totalorder %s68, %s69
      %p81 = scmp.eq.s32.totalorder %s24, 1
      %p82 = por %p80, %p81
      %p84 = scmp.ne.s32.totalorder %s69, %s83
      %p85 = scmp.eq.s32.totalorder %s24, 0
      %p86 = por %p84, %p85
      %s88 = sadd.s32 %s87, 1
      %p91 = scmp.eq.s32.totalorder %s18, 1
      %p92 = scmp.ne.s32.totalorder %s87, %s89
      %p93 = scmp.eq.s32.totalorder %s18, 0
      %p94 = por %p92, %p93
      %p95 = scmp.ne.s32.totalorder %s87, %s89
      %p96 = scmp.eq.s32.totalorder %s23, 1
      %p97 = por %p95, %p96
      %p98 = scmp.ne.s32.totalorder %s89, %s90
      %p99 = scmp.eq.s32.totalorder %s23, 0
      %p100 = por %p98, %p99
      %p101 = scmp.ne.s32.totalorder %s89, %s90
      %p102 = scmp.eq.s32.totalorder %s24, 1
      %p103 = por %p101, %p102
      %p105 = scmp.ne.s32.totalorder %s90, %s104
      %p106 = scmp.eq.s32.totalorder %s24, 0
      %p107 = por %p105, %p106
      %s109 = sadd.s32 %s108, 1
      %p112 = scmp.eq.s32.totalorder %s18, 1
      %p113 = scmp.ne.s32.totalorder %s108, %s110
      %p114 = scmp.eq.s32.totalorder %s18, 0
      %p115 = por %p113, %p114
      %p116 = scmp.ne.s32.totalorder %s108, %s110
      %p117 = scmp.eq.s32.totalorder %s23, 1
      %p118 = por %p116, %p117
      %p119 = scmp.ne.s32.totalorder %s110, %s111
      %p120 = scmp.eq.s32.totalorder %s23, 0
      %p121 = por %p119, %p120
      %p122 = scmp.ne.s32.totalorder %s110, %s111
      %p123 = scmp.eq.s32.totalorder %s24, 1
      %p124 = por %p122, %p123
      %p126 = scmp.ne.s32.totalorder %s111, %s125
      %p127 = scmp.eq.s32.totalorder %s24, 0
      %p128 = por %p126, %p127
      %s130 = sadd.s32 %s129, 1
      %p133 = scmp.eq.s32.totalorder %s18, 1
      %p134 = scmp.ne.s32.totalorder %s129, %s131
      %p135 = scmp.eq.s32.totalorder %s18, 0
      %p136 = por %p134, %p135
      %p137 = scmp.ne.s32.totalorder %s129, %s131
      %p138 = scmp.eq.s32.totalorder %s23, 1
      %p139 = por %p137, %p138
      %p140 = scmp.ne.s32.totalorder %s131, %s132
      %p141 = scmp.eq.s32.totalorder %s23, 0
      %p142 = por %p140, %p141
      %p143 = scmp.ne.s32.totalorder %s131, %s132
      %p144 = scmp.eq.s32.totalorder %s24, 1
      %p145 = por %p143, %p144
      %p147 = scmp.ne.s32.totalorder %s132, %s146
      %p148 = scmp.eq.s32.totalorder %s24, 0
      %p149 = por %p147, %p148
      %s150 = ssub.s32 %s25, %s37
      %s151 = ssub.s32 %s26, %s33
      %s152 = sor.u32 %s150, %s151
      %p153 = scmp.eq.s32.totalorder %s152, 0
      %s155 = sadd.s32 %s154, 1
      %s156 = scalar_select %p153, %s154, %s155
      %p159 = pneg %p153
      %p160 = scmp.eq.s32.totalorder %s18, 1
      %p161 = por %p159, %p160
      %p162 = scmp.ne.s32.totalorder %s154, %s157
      %p163 = scmp.eq.s32.totalorder %s18, 0
      %p164 = por %p162, %p163
      %p165 = scmp.ne.s32.totalorder %s154, %s157
      %p166 = scmp.eq.s32.totalorder %s23, 1
      %p167 = por %p165, %p166
      %p168 = scmp.ne.s32.totalorder %s157, %s158
      %p169 = scmp.eq.s32.totalorder %s23, 0
      %p170 = por %p168, %p169
      %p171 = scmp.ne.s32.totalorder %s157, %s158
      %p172 = scmp.eq.s32.totalorder %s24, 1
      %p173 = por %p171, %p172
      %p175 = scmp.ne.s32.totalorder %s158, %s174
      %p176 = scmp.eq.s32.totalorder %s24, 0
      %p177 = por %p175, %p176
      %p178 = scmp.le.s32.totalorder 1, %s18
      %p179 = scmp.lt.s32.totalorder %s18, 3
      %p180 = pnand %p178, %p179
      %p181 = pneg %p180
      // Predicated region
      $region9: #{tpu_custom_call.1} parent=5 // pred_check
        _
      $region10: #{tpu_custom_call.1} parent=5 // pred_check_branch
        %183 = sbr.rel (%p180) target = $region12
      $region11: #{tpu_custom_call.1} parent=5 // pred_region
        %s184 = ssub.s32 %s18, 1
        // Predicated region
        $region13: #{tpu_custom_call.1} parent=11 // pred_check
          %p185 = pneg %p79
        $region14: #{tpu_custom_call.1} parent=11 // pred_check_branch
          %187 = sbr.rel (%p185) target = $region16
        $region15: #{tpu_custom_call.1} parent=11 // pred_region
          %189 = vsyncadd [#allocation6], 0
          %s191 = sshll.u32 %s1, 4
          %s192 = int_to_ptr.hbm [resolvable:$true] %s191
          %s193 = sshll.u32 [#allocation5], 4
          %s194 = int_to_ptr.vmem [resolvable:$true] %s193
          %196 = dma.hbm_to_vmem [thread:$0]  %s192, 16, %s194, [#allocation6]
        $region16: #{tpu_custom_call.1} parent=11 // pred_fallthru
          _
        // Predicated region
        $region17: #{tpu_custom_call.1} parent=11 // pred_check
          %p197 = pneg %p100
        $region18: #{tpu_custom_call.1} parent=11 // pred_check_branch
          %199 = sbr.rel (%p197) target = $region20
        $region19: #{tpu_custom_call.1} parent=11 // pred_region
          _
        $region20: #{tpu_custom_call.1} parent=11 // pred_fallthru
          _
        // Predicated region
        $region21: #{tpu_custom_call.1} parent=11 // pred_check
          %p200 = pneg %p121
        $region22: #{tpu_custom_call.1} parent=11 // pred_check_branch
          %202 = sbr.rel (%p200) target = $region24
        $region23: #{tpu_custom_call.1} parent=11 // pred_region
          %204 = vsyncadd [#allocation6], 0
          %s205 = sshll.u32 %s3, 4
          %s206 = int_to_ptr.hbm [resolvable:$true] %s205
          %s207 = sshll.u32 [#allocation7], 4
          %s208 = int_to_ptr.vmem [resolvable:$true] %s207
          %213 = dma.hbm_to_vmem [thread:$0]  %s206, 256, %s208, [#allocation6], 64, 64, 4
        $region24: #{tpu_custom_call.1} parent=11 // pred_fallthru
          _
        // Predicated region
        $region25: #{tpu_custom_call.1} parent=11 // pred_check
          %p214 = pneg %p142
        $region26: #{tpu_custom_call.1} parent=11 // pred_check_branch
          %216 = sbr.rel (%p214) target = $region28
        $region27: #{tpu_custom_call.1} parent=11 // pred_region
          _
        $region28: #{tpu_custom_call.1} parent=11 // pred_fallthru
          _
      $region12: #{tpu_custom_call.1} parent=5 // pred_fallthru
        _
      %p217 = scmp.lt.s32.totalorder %s18, 2
      // Predicated region
      $region29: #{tpu_custom_call.1} parent=5 // pred_check
        %p218 = pneg %p217
      $region30: #{tpu_custom_call.1} parent=5 // pred_check_branch
        %220 = sbr.rel (%p218) target = $region32
      $region31: #{tpu_custom_call.1} parent=5 // pred_region
        // Predicated region
        $region33: #{tpu_custom_call.1} parent=31 // pred_check
          %p221 = pneg %p52
        $region34: #{tpu_custom_call.1} parent=31 // pred_check_branch
          %223 = sbr.rel (%p221) target = $region36
        $region35: #{tpu_custom_call.1} parent=31 // pred_region
          %s224 = sand.u32 %s42, 1
          %s225 = scalar_lea.sflag [#allocation3], %s224
          %s226 = sand.u32 %s42, 1
          %s227 = smul.addr %s226, 8
          %s228 = scalar_lea.vmem [#allocation2], %s227
          %230 = vsyncadd %s225, 0
          %s231 = sadd.s32 %s26, %s25
          %s232 = smul.addr %s231, 8
          %s233 = scalar_lea.hbm %s0, %s232
          %s235 = sshll.u32 %s233, 4
          %s236 = int_to_ptr.hbm [resolvable:$true] %s235
          %s237 = sshll.u32 %s228, 4
          %s238 = int_to_ptr.vmem [resolvable:$true] %s237
          %240 = dma.hbm_to_vmem [thread:$0]  %s236, 128, %s238, %s225
        $region36: #{tpu_custom_call.1} parent=31 // pred_fallthru
          _
      $region32: #{tpu_custom_call.1} parent=5 // pred_fallthru
        _
      %p241 = scmp.le.s32.totalorder 1, %s18
      %p242 = scmp.lt.s32.totalorder %s18, 3
      %p243 = pnand %p241, %p242
      %p244 = pneg %p243
      // Predicated region
      $region37: #{tpu_custom_call.1} parent=5 // pred_check
        _
      $region38: #{tpu_custom_call.1} parent=5 // pred_check_branch
        %246 = sbr.rel (%p243) target = $region40
      $region39: #{tpu_custom_call.1} parent=5 // pred_region
        %s247 = ssub.s32 %s18, 1
        %s248 = sand.u32 %s45, 1
        %s249 = scalar_lea.sflag [#allocation3], %s248
        %s250 = sand.u32 %s45, 1
        %s251 = smul.addr %s250, 8
        %s252 = scalar_lea.vmem [#allocation2], %s251
        // Predicated region
        $region41: #{tpu_custom_call.1} parent=39 // pred_check
          %p253 = pneg %p58
        $region42: #{tpu_custom_call.1} parent=39 // pred_check_branch
          %255 = sbr.rel (%p253) target = $region44
        $region43: #{tpu_custom_call.1} parent=39 // pred_region
          %257 = dma.done %s249, 128
        $region44: #{tpu_custom_call.1} parent=39 // pred_fallthru
          _
        // Predicated region
        $region45: #{tpu_custom_call.1} parent=39 // pred_check
          %p258 = pneg %p79
        $region46: #{tpu_custom_call.1} parent=39 // pred_check_branch
          %260 = sbr.rel (%p258) target = $region48
        $region47: #{tpu_custom_call.1} parent=39 // pred_region
          %262 = dma.done [#allocation6], 16
        $region48: #{tpu_custom_call.1} parent=39 // pred_fallthru
          _
        // Predicated region
        $region49: #{tpu_custom_call.1} parent=39 // pred_check
          %p263 = pneg %p121
        $region50: #{tpu_custom_call.1} parent=39 // pred_check_branch
          %265 = sbr.rel (%p263) target = $region52
        $region51: #{tpu_custom_call.1} parent=39 // pred_region
          %267 = dma.done [#allocation6], 256
        $region52: #{tpu_custom_call.1} parent=39 // pred_fallthru
          _
        %s268 = sand.u32 %s45, 1
        %s269 = scalar_lea.sflag [#allocation3], %s268
        %s270 = sand.u32 %s45, 1
        %s271 = smul.addr %s270, 8
        %s272 = scalar_lea.vmem [#allocation2], %s271
        %p273 = pneg %p58
        %p274 = pneg %p55
        %p275 = pneg %p79
        %p276 = pneg %p76
        %p277 = pneg %p100
        %p278 = pneg %p97
        %p279 = pneg %p121
        %p280 = pneg %p118
        %p281 = pneg %p142
        %p282 = pneg %p139
        %p283 = pneg %p170
        %p284 = pneg %p167
        %s285 = sand.u32 %s157, 1
        %s286 = scalar_lea.sflag [#allocation4], %s285
        %s287 = sand.u32 %s157, 1
        %s288 = smul.addr %s287, 4
        %s289 = scalar_lea.vmem [#allocation8], %s288
        %v291 = vld [vmem:[%s252] sm:$0xff]
        %v292 = vld [vmem:[#allocation5] sm:$0x1]
        %v293 = vld [vmem:[%s2] sm:$0x1]
        %vm294 = vcmask 261120
        %v295 = vsel %vm294, %v291, 0.0
        %296 = vadd.xlane.f32.xlu0 %v295
        %v297 = vpop.xlane.xlu0 %296
        %v298 = vrcp.pop 32.0
        %v299 = vmul.f32 32.0, %v298
        %v300 = vsub.f32 1.0, %v299
        %v301 = vmul.f32 %v298, %v300
        %v302 = vadd.f32 %v298, %v301
        %vm303 = vweird.f32 %v298
        %v304 = vsel %vm303, %v298, %v302
        %v305 = vmul.f32 %v297, %v304
        %v306 = vsub.f32 %v291, %v305
        %v307 = vmul.f32 %v306, %v306
        %v308 = vsel %vm294, %v307, 0.0
        %309 = vadd.xlane.f32.xlu0 %v308
        %v310 = vpop.xlane.xlu0 %309
        %v311 = vmul.f32 %v310, %v304
        %v312 = vadd.f32 %v311, 1e-05
        %v313 = vrsqrt.pop %v312
        %v314 = vmul.f32 %v313, %v312
        %v315 = vmul.f32 %v314, %v313
        %v316 = vmul.f32 0.5, %v315
        %v317 = vsub.f32 1.5, %v316
        %v318 = vmul.f32 %v313, %v317
        %vm319 = vweird.f32 %v312
        %vm320 = vweird.f32 %v313
        %vm321 = vmor %vm319, %vm320
        %v322 = vsel %vm321, %v313, %v318
        %v323 = vmul.f32 %v306, %v322
        %v325 = vperm.slane %v292, 0
        %v327 = vmul.f32 %v323, %v325
        %v329 = vperm.slane %v293, 0
        %v331 = vadd.f32 %v327, %v329
        %v332 = vpack.c.bf16 %v331, %v331
        %v333 = vld [vmem:[#allocation7] sm:$0xf]
        %v334 = vld [vmem:[#allocation7 + $0x4] sm:$0xf]
        %v335 = vld [vmem:[#allocation7 + $0x8] sm:$0xf]
        %v336 = vld [vmem:[#allocation7 + $0xc] sm:$0xf]
        %v337 = vld [vmem:[%s4] sm:$0x1]
        %v339 = vperm.slane %v337, 0
        %v345 = vunpack.c.l.b16 %v333
        %v346 = vunpack.c.l.b16 %v334
        %v347 = vunpack.c.l.b16 %v335
        %v348 = vunpack.c.l.b16 %v336
        %v349 = vpack.c.b16 %v346, %v345
        %v350 = vpack.c.b16 %v348, %v347
        %v354 = vsel %vm294, %v332, 0
        %356 = vmatpush.bf16.msra.mxu0 0
        %357 = vmatpush.bf16.msra.mxu0 0
        %358 = vmatpush.bf16.msra.mxu0 0
        %359 = vmatpush.bf16.msra.mxu0 0
        %360 = vmatpush.bf16.msra.mxu0 0
        %361 = vmatpush.bf16.msra.mxu0 0
        %362 = vmatpush.bf16.msra.mxu0 %v350
        %363 = vmatpush.bf16.msra.mxu0 %v349
        %364 = vmatmul.bf16.gmra.mxu0 %v354
        %v365 = vpop.f32.mrf.mxu0
        %v366 = vadd.f32 %v339, %v365
        %v367 = vpop.f32.mrf.mxu0
        %368 = vdwg.mxu0
        %v369 = vpack.c.bf16 %v366, %v366
        %vm370 = vcmask 781312
        %371 = vst.msk [vmem:[%s289] sm:$0xf] %vm370, %v369
        %s372 = sand.u32 %s157, 1
        %s373 = scalar_lea.sflag [#allocation4], %s372
        %s374 = sand.u32 %s157, 1
        %s375 = smul.addr %s374, 4
        %s376 = scalar_lea.vmem [#allocation8], %s375
        // Predicated region
        $region53: #{tpu_custom_call.1} parent=39 // pred_check
          %p377 = pneg %p167
        $region54: #{tpu_custom_call.1} parent=39 // pred_check_branch
          %379 = sbr.rel (%p377) target = $region56
        $region55: #{tpu_custom_call.1} parent=39 // pred_region
          %381 = vsyncadd %s373, 0
          %s382 = sadd.s32 %s28, %s27
          %s383 = smul.addr %s382, 4
          %s384 = scalar_lea.hbm %s5, %s383
          %s386 = sshll.u32 %s376, 4
          %s387 = int_to_ptr.vmem [resolvable:$true] %s386
          %s388 = sshll.u32 %s384, 4
          %s389 = int_to_ptr.hbm [resolvable:$true] %s388
          %391 = dma.vmem_to_hbm [thread:$0]  %s387, 64, %s389, %s373
        $region56: #{tpu_custom_call.1} parent=39 // pred_fallthru
          _
      $region40: #{tpu_custom_call.1} parent=5 // pred_fallthru
        _
      %p392 = scmp.le.s32.totalorder 2, %s18
      // Predicated region
      $region57: #{tpu_custom_call.1} parent=5 // pred_check
        %p393 = pneg %p392
      $region58: #{tpu_custom_call.1} parent=5 // pred_check_branch
        %395 = sbr.rel (%p393) target = $region60
      $region59: #{tpu_custom_call.1} parent=5 // pred_region
        %s396 = ssub.s32 %s18, 2
        // Predicated region
        $region61: #{tpu_custom_call.1} parent=59 // pred_check
          %p397 = pneg %p173
        $region62: #{tpu_custom_call.1} parent=59 // pred_check_branch
          %399 = sbr.rel (%p397) target = $region64
        $region63: #{tpu_custom_call.1} parent=59 // pred_region
          %s400 = sand.u32 %s158, 1
          %s401 = scalar_lea.sflag [#allocation4], %s400
          %s402 = sand.u32 %s158, 1
          %s403 = smul.addr %s402, 4
          %s404 = scalar_lea.vmem [#allocation8], %s403
          %406 = dma.done %s401, 64
        $region64: #{tpu_custom_call.1} parent=59 // pred_fallthru
          _
      $region60: #{tpu_custom_call.1} parent=5 // pred_fallthru
        _
    $region6: #{tpu_custom_call.1} parent=1 // loop_footer
      %s22 = sadd.s32 1, %s18
    $region7: #{tpu_custom_call.1} parent=1 // loop_footer_branch
      %17 = sbr.rel target = $region3
    $region8: #{tpu_custom_call.1} parent=1 // loop_exit
      _
    %407 = vsyncpa [#allocation3], 1
    %s408 = scalar_lea.sflag [#allocation3], 1
    %409 = vsyncpa %s408, 1
    %410 = vsyncpa [#allocation6], 1
    %411 = vsyncpa [#allocation4], 1
    %s412 = scalar_lea.sflag [#allocation4], 1
    %413 = vsyncpa %s412, 1

</llo_original>
